<compile_context>
chip_gen: v7x
topology: tpu7x:2x2x1
jax: 0.10.0
libtpu: 0.0.40
codegen_flags: <defaults>
</compile_context>

<pallas_src>
import numpy as np
import jax
import jax.numpy as jnp
from jax import lax
from jax.experimental import pallas as pl
from jax.experimental.pallas import tpu as pltpu

# Fixed (non-learned) RBF bin constants from __init__.
MU = (1.0, 0.9, 0.7, 0.5, 0.3, 0.1, -0.1, -0.3, -0.5, -0.7, -0.9)
SIGMA = (0.001,) + (0.1,) * 10
N_BINS = len(MU)

OUT_LANES = 128      # lane-dense output width (K=11 padded up to a full vreg lane width)
MASK_FILL = 3.0      # masked / out-of-bounds columns are moved here: every bin underflows
                     # to exactly 0 while the recurrence ratios stay finite (no 0*inf).

COL_SINGLE_MAX = 1024   # single-pass (no col reduction axis) up to this many columns
COL_TILE = 512          # col tile for long documents (multiple of 128)
ROW_TILE_MAX = 256      # row tile target (multiple of 8)

_DECAY = float(np.exp(-4.0))                       # per-bin ratio decay exp(-4)
_INV_2S0 = float(-1.0 / (2.0 * SIGMA[0] * SIGMA[0]))

# NOTE: the module's nn.Linear(n_bins, 1) classifier is created in __init__ but never
# used in forward(), so it is intentionally not materialized here.


def _make_akp_kernel(row_t, col_t, col, n_col_tiles):
    """Build a pooling kernel specialized on static tile geometry.

    Grid = (batch, row_tile, col_tile); the col_tile axis (last, "arbitrary") is the
    reduction axis.  Refs:
      m_ref   : (1, row_t, col_t)    similarity tile (f32 or bf16)
      mcol_ref: (1, 1,     col_t)    column (document) 0/1 mask tile
      mrow_ref: (1, row_t, 1)        row (query) 0/1 mask tile
      o_ref   : (1, row_t, 128)      lane-padded log_pooling_sum (bins in lanes 0..10)
      acc_ref : (N_BINS, row_t, 128) f32 per-bin accumulator (multi-col-tile variant only)
    """
    single = n_col_tiles == 1
    ragged_col = (col % col_t) != 0
    if not single:
        assert col_t % OUT_LANES == 0

    def lane_fold(x):
        # (row_t, col_t) -> (row_t, 128): 128-aligned lane slices are free vreg
        # selections and the adds are pure VPU work (no XLU).
        acc = x[:, 0:OUT_LANES]
        for j in range(1, col_t // OUT_LANES):
            acc = acc + x[:, j * OUT_LANES:(j + 1) * OUT_LANES]
        return acc

    def masked_tile(m_ref, mcol_ref, ci):
        m = m_ref[0].astype(jnp.float32)           # (row_t, col_t)
        mc = mcol_ref[0].astype(jnp.float32)       # (1, col_t)
        valid = mc > jnp.float32(0.0)              # 0/1 document mask
        if ragged_col:
            # Last col tile is ragged: mask the out-of-bounds lanes BEFORE any exp so
            # stale-VMEM garbage can never contribute to (or blow up) the column sum.
            lane = lax.broadcasted_iota(jnp.int32, (1, col_t), 1)
            valid = jnp.logical_and(valid, lane + ci * col_t < col)
        return jnp.where(valid, m, jnp.float32(MASK_FILL))

    def eval_bins(m, consume):
        """Evaluate the 11 RBF bins with 3 exps + 1 reciprocal per element.

        `consume(lane, pv)` is called once per bin; pv is dead right after, which keeps
        the number of live full-tile temporaries small.
        """
        # bin 0: mu = 1.0, sigma = 0.001 (its own exp)
        d0 = m - jnp.float32(MU[0])
        consume(0, jnp.exp(d0 * d0 * jnp.float32(_INV_2S0)))
        # bins 1..10: sigma = 0.1, mu = 0.9 .. -0.9 (uniform step 0.2).  Start the
        # multiplicative recurrence at the middle bin (mu = 0.1) and walk outwards so the
        # running value never underflows while still approaching m.
        t = m - jnp.float32(0.1)
        e_mid = jnp.exp(jnp.float32(-50.0) * t * t)               # bin 5 (mu = 0.1)
        consume(5, e_mid)
        eu = jnp.float32(20.0) * t - jnp.float32(2.0)
        r_up = jnp.exp(eu)                                        # ratio toward larger mu
        # exp(-eu - 4) == exp(-4) / exp(eu): one reciprocal instead of a third chain exp.
        r_dn = jnp.float32(_DECAY) * pl.reciprocal(r_up, approx=False)
        e, r = e_mid, r_up
        for lane in (4, 3, 2, 1):                                 # mu = 0.3, 0.5, 0.7, 0.9
            e = e * r
            consume(lane, e)
            r = r * jnp.float32(_DECAY)
        e, r = e_mid, r_dn
        for lane in (6, 7, 8, 9, 10):                             # mu = -0.1 .. -0.9
            e = e * r
            consume(lane, e)
            r = r * jnp.float32(_DECAY)

    def finalize(sums, mrow_ref, o_ref):
        # Lane placement (bins -> lanes 0..10 of a 128-wide slab) happens exactly once.
        pad = jnp.zeros((row_t, OUT_LANES - N_BINS), jnp.float32)
        slab = jnp.concatenate(sums + [pad], axis=-1)             # (row_t, 128)
        mr = mrow_ref[0].astype(jnp.float32)                      # (row_t, 1)
        lps = jnp.log(jnp.maximum(slab, jnp.float32(1e-10))) * jnp.float32(0.01) * mr
        o_ref[0] = lps.astype(o_ref.dtype)

    if single:
        def kernel(m_ref, mcol_ref, mrow_ref, o_ref):
            m = masked_tile(m_ref, mcol_ref, 0)
            sums = [None] * N_BINS

            def consume(lane, pv):
                sums[lane] = jnp.sum(pv, axis=-1, keepdims=True)

            eval_bins(m, consume)
            finalize(sums, mrow_ref, o_ref)

        return kernel

    def kernel(m_ref, mcol_ref, mrow_ref, o_ref, acc_ref):
        ci = pl.program_id(2)

        @pl.when(ci == 0)
        def _init():
            acc_ref[...] = jnp.zeros_like(acc_ref)

        m = masked_tile(m_ref, mcol_ref, ci)

        def consume(lane, pv):
            # Defer the 128->1 cross-lane (XLU) reduction to the finalize step: per col
            # tile only pure-VPU lane-block adds touch the per-bin accumulator.
            acc_ref[lane] += lane_fold(pv)

        eval_bins(m, consume)

        @pl.when(ci == pl.num_programs(2) - 1)
        def _final():
            sums = [jnp.sum(acc_ref[k], axis=-1, keepdims=True) for k in range(N_BINS)]
            finalize(sums, mrow_ref, o_ref)

    return kernel


def _pooling_pallas(matrix, mask_row, mask_col):
    """matrix (B,row,col,1) -> log_pooling_sum (B,row,K) via Pallas (no HBM padding pass)."""
    B, row, col, _ = matrix.shape
    m3 = matrix[..., 0]                          # (B,row,col); free reshape, dtype kept
    mask_row = mask_row.astype(jnp.float32)
    mask_col = mask_col.astype(jnp.float32)
    mc3 = mask_col[:, None, :]                   # (B, 1, col)
    mr3 = mask_row[:, :, None]                   # (B, row, 1)

    # Column tiling: single pass when the document fits (no reduction axis/accumulator),
    # otherwise 512-column tiles (multiple of 128, so a ragged last tile is legal).
    col_t = col if col <= COL_SINGLE_MAX else COL_TILE
    n_col = pl.cdiv(col, col_t)

    # Row tiling: full rows when small, else 256-row tiles.  If that leaves fewer than 2
    # blocks on the parallel axes (B == 1, short query), split rows so both v7x
    # TensorCores get work; v5e/v6e (1 TC) are unaffected.
    row_t = row if row <= ROW_TILE_MAX else ROW_TILE_MAX
    if B * pl.cdiv(row, row_t) < 2 and row > 8:
        row_t = min(row_t, max(8, 8 * pl.cdiv(pl.cdiv(row, 2), 8)))
    n_row = pl.cdiv(row, row_t)

    kernel = _make_akp_kernel(row_t, col_t, col, n_col)
    scratch = [] if n_col == 1 else [pltpu.VMEM((N_BINS, row_t, OUT_LANES), jnp.float32)]

    cost = pl.CostEstimate(
        flops=int(45 * B * row * col),
        transcendentals=int(4 * B * row * col),       # 3 exps + 1 reciprocal per element
        bytes_accessed=int(m3.dtype.itemsize * B * row * col
                           + 4 * B * (row + col) + 4 * B * row * OUT_LANES),
    )

    out = pl.pallas_call(
        kernel,
        out_shape=jax.ShapeDtypeStruct((B, row, OUT_LANES), jnp.float32),
        grid_spec=pltpu.PrefetchScalarGridSpec(
            num_scalar_prefetch=0,
            grid=(B, n_row, n_col),
            in_specs=[
                pl.BlockSpec((1, row_t, col_t), lambda b, r, c: (b, r, c)),
                pl.BlockSpec((1, 1, col_t), lambda b, r, c: (b, 0, c)),
                pl.BlockSpec((1, row_t, 1), lambda b, r, c: (b, r, 0)),
            ],
            out_specs=pl.BlockSpec((1, row_t, OUT_LANES), lambda b, r, c: (b, r, 0)),
            scratch_shapes=scratch,
        ),
        compiler_params=pltpu.CompilerParams(
            dimension_semantics=("parallel", "parallel", "arbitrary"),
            vmem_limit_bytes=32 * 1024 * 1024,        # explicit budget (v5e default is 16 MiB)
        ),
        cost_estimate=cost,
    )(m3, mc3, mr3)

    return out[:, :, :N_BINS]        # drop the lane padding


def attentive_kernel_pooling(matrix, mask_row, mask_col, attention=None):
    """Forward pass matching the PyTorch module exactly."""
    B, row, col, _ = matrix.shape
    mu4 = jnp.asarray(MU, jnp.float32).reshape(1, 1, 1, N_BINS)
    sigma4 = jnp.asarray(SIGMA, jnp.float32).reshape(1, 1, 1, N_BINS)

    # Hot path (exp / mask / sum over col / log / mask) in the Pallas kernel.
    log_pooling_sum = _pooling_pallas(matrix, mask_row, mask_col)  # (B, row, K)

    if attention is not None:
        # TODO(synk): attention-combine tail kept in plain JAX -- it is a tiny (B,row,K)
        # tensor and faithfully reproduces the module's broadcasting (attention (B,row,1)
        # vs mu (1,1,1,K) -> (1,B,row,K), softmax over dim=1, i.e. the batch axis).
        att = attention[:, :, None]                                   # (B, row, 1)
        att = jnp.exp(-((att - mu4) ** 2) / sigma4 ** 2 / 2)          # (1, B, row, K)
        mask_attention = jnp.broadcast_to(mask_row[:, :, None].astype(jnp.float32),
                                          (B, row, N_BINS))
        att = jnp.where(mask_attention == 0, -1000000000.0, att)      # (1, B, row, K)
        att = jax.nn.softmax(att, axis=1)
        out = jnp.sum(log_pooling_sum * att, axis=-2)                 # (1, B, K)
    else:
        out = jnp.sum(log_pooling_sum, axis=-2)                       # (B, K)
    return out


def _reference(matrix, mask_row, mask_col, attention=None):
    """Pure-JAX transliteration of the PyTorch forward, for verification."""
    B, row, col, _ = matrix.shape
    mu = jnp.asarray(MU, jnp.float32).reshape(1, 1, 1, N_BINS)
    sigma = jnp.asarray(SIGMA, jnp.float32).reshape(1, 1, 1, N_BINS)
    mc = mask_col[:, None, :]                                          # (B, 1, col)
    pooling_value = jnp.exp(-((matrix - mu) ** 2) / sigma ** 2 / 2) * mc[..., None]
    pooling_sum = jnp.sum(pooling_value, -2)
    lps = jnp.log(jnp.maximum(pooling_sum, 1e-10)) * 0.01 * mask_row[..., None]
    if attention is not None:
        att = attention[..., None]
        att = jnp.exp(-((att - mu) ** 2) / sigma ** 2 / 2)
        mask_attention = jnp.broadcast_to(mask_row[..., None], (B, row, N_BINS))
        att = jnp.where(mask_attention == 0, -1000000000.0, att)
        att = jax.nn.softmax(att, axis=1)
        return jnp.sum(lps * att, -2)
    return jnp.sum(lps, -2)


def _run_case(B, ROW, COL, row_lens, col_lens, key):
    k1, k2 = jax.random.split(key)
    # Similarity matrix in [-1, 1], shape (B, row, col, 1) like the KNRM sim view.
    matrix = jax.random.uniform(k1, (B, ROW, COL, 1), jnp.float32, minval=-1.0, maxval=1.0)
    mask_row = (jnp.arange(ROW)[None, :] < jnp.asarray(row_lens)[:, None]).astype(jnp.float32)
    mask_col = (jnp.arange(COL)[None, :] < jnp.asarray(col_lens)[:, None]).astype(jnp.float32)
    attention = jax.random.uniform(k2, (B, ROW), jnp.float32, minval=-1.0, maxval=1.0)
    for att in (None, attention):
        out = jax.block_until_ready(attentive_kernel_pooling(matrix, mask_row, mask_col, att))
        ref = jax.block_until_ready(_reference(matrix, mask_row, mask_col, att))
        np.testing.assert_allclose(np.asarray(out), np.asarray(ref), rtol=1e-4, atol=1e-5)


if __name__ == "__main__":
    key = jax.random.PRNGKey(0)
    k1, k2 = jax.random.split(key)

    # Small canonical shapes: single-col-tile kernel variant, full (non-ragged) blocks.
    _run_case(2, 8, 16, [8, 5], [16, 11], k1)

    # Long-document shapes: multiple col tiles (per-bin VMEM accumulator + deferred XLU
    # reduce), ragged last row/col tiles with NO wrapper-side padding, and the B == 1
    # row split that feeds both v7x TensorCores.
    _run_case(1, 20, 1100, [17], [1000], k2)

    print("KERNEL_OK")
</pallas_src>

<mosaic_0001>
module attributes {stable_mosaic.version = 11 : i64} {
  func.func @kernel(%arg0: i32, %arg1: i32, %arg2: i32, %arg3: memref<1x8x16xf32, #tpu.memory_space<vmem>>, %arg4: memref<1x1x16xf32, #tpu.memory_space<vmem>>, %arg5: memref<1x8x1xf32, #tpu.memory_space<vmem>>, %arg6: memref<1x8x128xf32, #tpu.memory_space<vmem>>) attributes {dimension_semantics = [#tpu.dimension_semantics<parallel>, #tpu.dimension_semantics<parallel>, #tpu.dimension_semantics<arbitrary>], iteration_bounds = array<i64: 2, 1, 1>, scalar_prefetch = 0 : i64, scratch_operands = 0 : i64, tpu.core_type = #tpu.core_type<tc>, window_params = [{transform_indices = @transform_0, window_bounds = array<i64: 1, 8, 16>}, {transform_indices = @transform_1, window_bounds = array<i64: 1, 1, 16>}, {transform_indices = @transform_2, window_bounds = array<i64: 1, 8, 1>}, {transform_indices = @transform_3, window_bounds = array<i64: 1, 8, 128>}]} {
    %c0 = arith.constant 0 : index
    %c0_0 = arith.constant 0 : index
    %c0_1 = arith.constant 0 : index
    %0 = vector.load %arg3[%c0, %c0_0, %c0_1] : memref<1x8x16xf32, #tpu.memory_space<vmem>>, vector<1x8x16xf32>
    %1 = vector.shape_cast %0 : vector<1x8x16xf32> to vector<8x16xf32>
    %c0_2 = arith.constant 0 : index
    %c0_3 = arith.constant 0 : index
    %c0_4 = arith.constant 0 : index
    %2 = vector.load %arg4[%c0_2, %c0_3, %c0_4] : memref<1x1x16xf32, #tpu.memory_space<vmem>>, vector<1x1x16xf32>
    %3 = vector.shape_cast %2 : vector<1x1x16xf32> to vector<1x16xf32>
    %cst = arith.constant 0.000000e+00 : f32
    %4 = vector.broadcast %cst : f32 to vector<1x16xf32>
    %5 = arith.cmpf ogt, %3, %4 : vector<1x16xf32>
    %cst_5 = arith.constant 3.000000e+00 : f32
    %6 = vector.shape_cast %5 : vector<1x16xi1> to vector<1x16xi1>
    %7 = vector.broadcast %6 : vector<1x16xi1> to vector<8x16xi1>
    %8 = vector.broadcast %cst_5 : f32 to vector<8x16xf32>
    %9 = arith.select %7, %1, %8 : vector<8x16xi1>, vector<8x16xf32>
    %cst_6 = arith.constant 1.000000e+00 : f32
    %10 = vector.broadcast %cst_6 : f32 to vector<8x16xf32>
    %11 = arith.subf %9, %10 : vector<8x16xf32>
    %12 = arith.mulf %11, %11 : vector<8x16xf32>
    %cst_7 = arith.constant -5.000000e+05 : f32
    %13 = vector.broadcast %cst_7 : f32 to vector<8x16xf32>
    %14 = arith.mulf %12, %13 : vector<8x16xf32>
    %15 = math.exp %14 : vector<8x16xf32>
    %cst_8 = arith.constant dense<0.000000e+00> : vector<8xf32>
    %16 = vector.multi_reduction <add>, %15, %cst_8 [1] : vector<8x16xf32> to vector<8xf32>
    %17 = vector.shape_cast %16 : vector<8xf32> to vector<8x1xf32>
    %cst_9 = arith.constant 1.000000e-01 : f32
    %18 = vector.broadcast %cst_9 : f32 to vector<8x16xf32>
    %19 = arith.subf %9, %18 : vector<8x16xf32>
    %cst_10 = arith.constant -5.000000e+01 : f32
    %20 = vector.broadcast %cst_10 : f32 to vector<8x16xf32>
    %21 = arith.mulf %20, %19 : vector<8x16xf32>
    %22 = arith.mulf %21, %19 : vector<8x16xf32>
    %23 = math.exp %22 : vector<8x16xf32>
    %cst_11 = arith.constant dense<0.000000e+00> : vector<8xf32>
    %24 = vector.multi_reduction <add>, %23, %cst_11 [1] : vector<8x16xf32> to vector<8xf32>
    %25 = vector.shape_cast %24 : vector<8xf32> to vector<8x1xf32>
    %cst_12 = arith.constant 2.000000e+01 : f32
    %26 = vector.broadcast %cst_12 : f32 to vector<8x16xf32>
    %27 = arith.mulf %26, %19 : vector<8x16xf32>
    %cst_13 = arith.constant 2.000000e+00 : f32
    %28 = vector.broadcast %cst_13 : f32 to vector<8x16xf32>
    %29 = arith.subf %27, %28 : vector<8x16xf32>
    %30 = math.exp %29 : vector<8x16xf32>
    %31 = tpu.reciprocal %30 : vector<8x16xf32> -> vector<8x16xf32>
    %cst_14 = arith.constant 0.0183156393 : f32
    %32 = vector.broadcast %cst_14 : f32 to vector<8x16xf32>
    %33 = arith.mulf %32, %31 : vector<8x16xf32>
    %34 = arith.mulf %23, %30 : vector<8x16xf32>
    %cst_15 = arith.constant dense<0.000000e+00> : vector<8xf32>
    %35 = vector.multi_reduction <add>, %34, %cst_15 [1] : vector<8x16xf32> to vector<8xf32>
    %36 = vector.shape_cast %35 : vector<8xf32> to vector<8x1xf32>
    %cst_16 = arith.constant 0.0183156393 : f32
    %37 = vector.broadcast %cst_16 : f32 to vector<8x16xf32>
    %38 = arith.mulf %30, %37 : vector<8x16xf32>
    %39 = arith.mulf %34, %38 : vector<8x16xf32>
    %cst_17 = arith.constant dense<0.000000e+00> : vector<8xf32>
    %40 = vector.multi_reduction <add>, %39, %cst_17 [1] : vector<8x16xf32> to vector<8xf32>
    %41 = vector.shape_cast %40 : vector<8xf32> to vector<8x1xf32>
    %cst_18 = arith.constant 0.0183156393 : f32
    %42 = vector.broadcast %cst_18 : f32 to vector<8x16xf32>
    %43 = arith.mulf %38, %42 : vector<8x16xf32>
    %44 = arith.mulf %39, %43 : vector<8x16xf32>
    %cst_19 = arith.constant dense<0.000000e+00> : vector<8xf32>
    %45 = vector.multi_reduction <add>, %44, %cst_19 [1] : vector<8x16xf32> to vector<8xf32>
    %46 = vector.shape_cast %45 : vector<8xf32> to vector<8x1xf32>
    %cst_20 = arith.constant 0.0183156393 : f32
    %47 = vector.broadcast %cst_20 : f32 to vector<8x16xf32>
    %48 = arith.mulf %43, %47 : vector<8x16xf32>
    %49 = arith.mulf %44, %48 : vector<8x16xf32>
    %cst_21 = arith.constant dense<0.000000e+00> : vector<8xf32>
    %50 = vector.multi_reduction <add>, %49, %cst_21 [1] : vector<8x16xf32> to vector<8xf32>
    %51 = vector.shape_cast %50 : vector<8xf32> to vector<8x1xf32>
    %52 = arith.mulf %23, %33 : vector<8x16xf32>
    %cst_22 = arith.constant dense<0.000000e+00> : vector<8xf32>
    %53 = vector.multi_reduction <add>, %52, %cst_22 [1] : vector<8x16xf32> to vector<8xf32>
    %54 = vector.shape_cast %53 : vector<8xf32> to vector<8x1xf32>
    %cst_23 = arith.constant 0.0183156393 : f32
    %55 = vector.broadcast %cst_23 : f32 to vector<8x16xf32>
    %56 = arith.mulf %33, %55 : vector<8x16xf32>
    %57 = arith.mulf %52, %56 : vector<8x16xf32>
    %cst_24 = arith.constant dense<0.000000e+00> : vector<8xf32>
    %58 = vector.multi_reduction <add>, %57, %cst_24 [1] : vector<8x16xf32> to vector<8xf32>
    %59 = vector.shape_cast %58 : vector<8xf32> to vector<8x1xf32>
    %cst_25 = arith.constant 0.0183156393 : f32
    %60 = vector.broadcast %cst_25 : f32 to vector<8x16xf32>
    %61 = arith.mulf %56, %60 : vector<8x16xf32>
    %62 = arith.mulf %57, %61 : vector<8x16xf32>
    %cst_26 = arith.constant dense<0.000000e+00> : vector<8xf32>
    %63 = vector.multi_reduction <add>, %62, %cst_26 [1] : vector<8x16xf32> to vector<8xf32>
    %64 = vector.shape_cast %63 : vector<8xf32> to vector<8x1xf32>
    %cst_27 = arith.constant 0.0183156393 : f32
    %65 = vector.broadcast %cst_27 : f32 to vector<8x16xf32>
    %66 = arith.mulf %61, %65 : vector<8x16xf32>
    %67 = arith.mulf %62, %66 : vector<8x16xf32>
    %cst_28 = arith.constant dense<0.000000e+00> : vector<8xf32>
    %68 = vector.multi_reduction <add>, %67, %cst_28 [1] : vector<8x16xf32> to vector<8xf32>
    %69 = vector.shape_cast %68 : vector<8xf32> to vector<8x1xf32>
    %cst_29 = arith.constant 0.0183156393 : f32
    %70 = vector.broadcast %cst_29 : f32 to vector<8x16xf32>
    %71 = arith.mulf %66, %70 : vector<8x16xf32>
    %72 = arith.mulf %67, %71 : vector<8x16xf32>
    %cst_30 = arith.constant dense<0.000000e+00> : vector<8xf32>
    %73 = vector.multi_reduction <add>, %72, %cst_30 [1] : vector<8x16xf32> to vector<8xf32>
    %74 = vector.shape_cast %73 : vector<8xf32> to vector<8x1xf32>
    %cst_31 = arith.constant 0.000000e+00 : f32
    %75 = vector.broadcast %cst_31 : f32 to vector<8x117xf32>
    %76 = tpu.concatenate %17, %51, %46, %41, %36, %25, %54, %59, %64, %69, %74, %75 in 1 : vector<8x1xf32>, vector<8x1xf32>, vector<8x1xf32>, vector<8x1xf32>, vector<8x1xf32>, vector<8x1xf32>, vector<8x1xf32>, vector<8x1xf32>, vector<8x1xf32>, vector<8x1xf32>, vector<8x1xf32>, vector<8x117xf32> -> vector<8x128xf32>
    %c0_32 = arith.constant 0 : index
    %c0_33 = arith.constant 0 : index
    %c0_34 = arith.constant 0 : index
    %77 = vector.load %arg5[%c0_32, %c0_33, %c0_34] : memref<1x8x1xf32, #tpu.memory_space<vmem>>, vector<1x8x1xf32>
    %78 = vector.shape_cast %77 : vector<1x8x1xf32> to vector<8x1xf32>
    %cst_35 = arith.constant 1.000000e-10 : f32
    %79 = vector.broadcast %cst_35 : f32 to vector<8x128xf32>
    %80 = arith.maximumf %76, %79 : vector<8x128xf32>
    %81 = math.log %80 : vector<8x128xf32>
    %cst_36 = arith.constant 0.00999999977 : f32
    %82 = vector.broadcast %cst_36 : f32 to vector<8x128xf32>
    %83 = arith.mulf %81, %82 : vector<8x128xf32>
    %84 = vector.broadcast %78 : vector<8x1xf32> to vector<8x128xf32>
    %85 = arith.mulf %83, %84 : vector<8x128xf32>
    %c0_37 = arith.constant 0 : index
    %c0_38 = arith.constant 0 : index
    %c0_39 = arith.constant 0 : index
    %86 = vector.load %arg6[%c0_37, %c0_38, %c0_39] : memref<1x8x128xf32, #tpu.memory_space<vmem>>, vector<1x8x128xf32>
    %87 = vector.shape_cast %86 : vector<1x8x128xf32> to vector<8x128xf32>
    %88 = vector.shape_cast %85 : vector<8x128xf32> to vector<1x8x128xf32>
    tpu.vector_store %arg6[%c0_37, %c0_38, %c0_39], %88 {strides = array<i32>} : memref<1x8x128xf32, #tpu.memory_space<vmem>>, vector<1x8x128xf32>,
    return
  }
  func.func @transform_0(%arg0: i32, %arg1: i32, %arg2: i32) -> (i32, i32, i32) {
    %c0_i32 = arith.constant 0 : i32
    return %arg0, %arg1, %arg2 : i32, i32, i32
  }
  func.func @transform_1(%arg0: i32, %arg1: i32, %arg2: i32) -> (i32, i32, i32) {
    %c0_i32 = arith.constant 0 : i32
    %c0_i32_0 = arith.constant 0 : i32
    return %arg0, %c0_i32, %arg2 : i32, i32, i32
  }
  func.func @transform_2(%arg0: i32, %arg1: i32, %arg2: i32) -> (i32, i32, i32) {
    %c0_i32 = arith.constant 0 : i32
    %c0_i32_0 = arith.constant 0 : i32
    return %arg0, %arg1, %c0_i32 : i32, i32, i32
  }
  func.func @transform_3(%arg0: i32, %arg1: i32, %arg2: i32) -> (i32, i32, i32) {
    %c0_i32 = arith.constant 0 : i32
    %c0_i32_0 = arith.constant 0 : i32
    return %arg0, %arg1, %c0_i32 : i32, i32, i32
  }
}

</mosaic_0001>

<llo_original>
// kernel: tpu_custom_call.1
$region0: #{tpu_custom_call.1}
  #allocation0 [shape = 'u32[]', space=smem, size = 0x4, offset = 0x4, fixed_abs, tag = 'smem constant byte address 0x4 - core index']
  #allocation1 [shape = 'u32[144,128]{1,0:T(1,128)}', space=vmem, size = 0x12000, scoped, tag = 'internal scratch']
  %s0 = inlined_call_operand.vmem [shape: f32[2,8,16], index: 0, kind: input, shape index: {}]
  %s1 = inlined_call_operand.vmem [shape: f32[2,1,16], index: 1, kind: input, shape index: {}]
  %s2 = inlined_call_operand.vmem [shape: f32[2,8,1], index: 2, kind: input, shape index: {}]
  %s3 = inlined_call_operand.hbm [shape: f32[2,8,128], index: 3, kind: output, shape index: {}]
  %s4 = sld [smem:[#allocation0]]
  $region45: #{tpu_custom_call.1} parent=0
    _
  %s6 = ssub.s32 1, %s4
  %s7 = scalar_select 0, %s6, %s4
  $region1: #{tpu_custom_call.1} parent=0
    #allocation2 [shape = 'u8[8192]{0}', space=vmem, size = 0x2000, scoped, tag = 'output window, operand 0']
    #allocation3 [shape = 's32[2]{0}', space=sflag, size = 0x8, scoped, tag = 'scoped memory for tpu_custom_call.1']
    %8 = vsyncpa [#allocation3], 0
    %s9 = scalar_lea.sflag [#allocation3], 1
    %10 = vsyncpa %s9, 0
    loop: start=0, step=1, limit=4
    $region2: #{tpu_custom_call.1} parent=1 // loop_pre_header
      _
    $region3: #{tpu_custom_call.1} parent=1 // loop_header
      %s12 = sphi 0, %s16
      %p13 = scmp.ge.s32.totalorder %s12, 4
      %s19 = sphi 0, %s38
      %s20 = sphi 0, %s34
      %s21 = sphi 0, %s30
      %s22 = sphi 0, %s19
      %s23 = sphi 0, %s20
      %s24 = sphi 0, %s21
      %s25 = sphi 0, %s22
      %s26 = sphi 0, %s23
      %s27 = sphi 0, %s24
      %s45 = sphi 0, %s47
      %s48 = sphi 0, %s45
      %s49 = sphi 0, %s48
      %s65 = sphi 0, %s49
      %s73 = sphi 0, %s75
      %s76 = sphi 0, %s73
      %s77 = sphi 0, %s76
      %s93 = sphi 0, %s77
      %s101 = sphi 0, %s103
      %s104 = sphi 0, %s101
      %s105 = sphi 0, %s104
      %s121 = sphi 0, %s105
      %s129 = sphi 0, %s131
      %s132 = sphi 0, %s129
      %s133 = sphi 0, %s132
      %s149 = sphi 0, %s133
    $region4: #{tpu_custom_call.1} parent=1 // loop_header_branch
      %15 = sbr.rel (%p13) target = $region8
    $region5: #{tpu_custom_call.1} parent=1 // loop_body
      %s17 = ssub.s32 %s12, 1
      %s18 = ssub.s32 %s12, 2
      %s28 = sadd.s32 1, %s21
      %p29 = scmp.ge.s32.totalorder %s28, 1
      %s30 = scalar_select %p29, 0, %s28
      %s31 = sadd.s32 1, %s20
      %s32 = scalar_select %p29, %s31, %s20
      %p33 = scmp.ge.s32.totalorder %s32, 1
      %s34 = scalar_select %p33, 0, %s32
      %s35 = sadd.s32 1, %s19
      %s36 = scalar_select %p33, %s35, %s19
      %p37 = scmp.ge.s32.totalorder %s36, 2
      %s38 = scalar_select %p37, 0, %s36
      %s39 = ssub.s32 %s19, %s38
      %s40 = ssub.s32 %s20, %s34
      %s41 = sor.u32 %s39, %s40
      %s42 = ssub.s32 %s21, %s30
      %s43 = sor.u32 %s41, %s42
      %p44 = scmp.eq.s32.totalorder %s43, 0
      %s46 = sadd.s32 %s45, 1
      %s47 = scalar_select %p44, %s45, %s46
      %p50 = pneg %p44
      %p51 = scmp.eq.s32.totalorder %s12, 1
      %p52 = por %p50, %p51
      %p53 = scmp.ne.s32.totalorder %s45, %s48
      %p54 = scmp.eq.s32.totalorder %s12, 0
      %p55 = por %p53, %p54
      %p56 = scmp.ne.s32.totalorder %s45, %s48
      %p57 = scmp.eq.s32.totalorder %s17, 1
      %p58 = por %p56, %p57
      %p59 = scmp.ne.s32.totalorder %s48, %s49
      %p60 = scmp.eq.s32.totalorder %s17, 0
      %p61 = por %p59, %p60
      %p62 = scmp.ne.s32.totalorder %s48, %s49
      %p63 = scmp.eq.s32.totalorder %s18, 1
      %p64 = por %p62, %p63
      %p66 = scmp.ne.s32.totalorder %s49, %s65
      %p67 = scmp.eq.s32.totalorder %s18, 0
      %p68 = por %p66, %p67
      %s69 = ssub.s32 %s19, %s38
      %s70 = ssub.s32 %s21, %s30
      %s71 = sor.u32 %s69, %s70
      %p72 = scmp.eq.s32.totalorder %s71, 0
      %s74 = sadd.s32 %s73, 1
      %s75 = scalar_select %p72, %s73, %s74
      %p78 = pneg %p72
      %p79 = scmp.eq.s32.totalorder %s12, 1
      %p80 = por %p78, %p79
      %p81 = scmp.ne.s32.totalorder %s73, %s76
      %p82 = scmp.eq.s32.totalorder %s12, 0
      %p83 = por %p81, %p82
      %p84 = scmp.ne.s32.totalorder %s73, %s76
      %p85 = scmp.eq.s32.totalorder %s17, 1
      %p86 = por %p84, %p85
      %p87 = scmp.ne.s32.totalorder %s76, %s77
      %p88 = scmp.eq.s32.totalorder %s17, 0
      %p89 = por %p87, %p88
      %p90 = scmp.ne.s32.totalorder %s76, %s77
      %p91 = scmp.eq.s32.totalorder %s18, 1
      %p92 = por %p90, %p91
      %p94 = scmp.ne.s32.totalorder %s77, %s93
      %p95 = scmp.eq.s32.totalorder %s18, 0
      %p96 = por %p94, %p95
      %s97 = ssub.s32 %s19, %s38
      %s98 = ssub.s32 %s20, %s34
      %s99 = sor.u32 %s97, %s98
      %p100 = scmp.eq.s32.totalorder %s99, 0
      %s102 = sadd.s32 %s101, 1
      %s103 = scalar_select %p100, %s101, %s102
      %p106 = pneg %p100
      %p107 = scmp.eq.s32.totalorder %s12, 1
      %p108 = por %p106, %p107
      %p109 = scmp.ne.s32.totalorder %s101, %s104
      %p110 = scmp.eq.s32.totalorder %s12, 0
      %p111 = por %p109, %p110
      %p112 = scmp.ne.s32.totalorder %s101, %s104
      %p113 = scmp.eq.s32.totalorder %s17, 1
      %p114 = por %p112, %p113
      %p115 = scmp.ne.s32.totalorder %s104, %s105
      %p116 = scmp.eq.s32.totalorder %s17, 0
      %p117 = por %p115, %p116
      %p118 = scmp.ne.s32.totalorder %s104, %s105
      %p119 = scmp.eq.s32.totalorder %s18, 1
      %p120 = por %p118, %p119
      %p122 = scmp.ne.s32.totalorder %s105, %s121
      %p123 = scmp.eq.s32.totalorder %s18, 0
      %p124 = por %p122, %p123
      %s125 = ssub.s32 %s19, %s38
      %s126 = ssub.s32 %s20, %s34
      %s127 = sor.u32 %s125, %s126
      %p128 = scmp.eq.s32.totalorder %s127, 0
      %s130 = sadd.s32 %s129, 1
      %s131 = scalar_select %p128, %s129, %s130
      %p134 = pneg %p128
      %p135 = scmp.eq.s32.totalorder %s12, 1
      %p136 = por %p134, %p135
      %p137 = scmp.ne.s32.totalorder %s129, %s132
      %p138 = scmp.eq.s32.totalorder %s12, 0
      %p139 = por %p137, %p138
      %p140 = scmp.ne.s32.totalorder %s129, %s132
      %p141 = scmp.eq.s32.totalorder %s17, 1
      %p142 = por %p140, %p141
      %p143 = scmp.ne.s32.totalorder %s132, %s133
      %p144 = scmp.eq.s32.totalorder %s17, 0
      %p145 = por %p143, %p144
      %p146 = scmp.ne.s32.totalorder %s132, %s133
      %p147 = scmp.eq.s32.totalorder %s18, 1
      %p148 = por %p146, %p147
      %p150 = scmp.ne.s32.totalorder %s133, %s149
      %p151 = scmp.eq.s32.totalorder %s18, 0
      %p152 = por %p150, %p151
      %p153 = scmp.le.s32.totalorder 1, %s12
      %p154 = scmp.lt.s32.totalorder %s12, 3
      %p155 = pnand %p153, %p154
      %p156 = pneg %p155
      // Predicated region
      $region9: #{tpu_custom_call.1} parent=5 // pred_check
        _
      $region10: #{tpu_custom_call.1} parent=5 // pred_check_branch
        %158 = sbr.rel (%p155) target = $region12
      $region11: #{tpu_custom_call.1} parent=5 // pred_region
        %s159 = ssub.s32 %s12, 1
      $region12: #{tpu_custom_call.1} parent=5 // pred_fallthru
        _
      %p160 = scmp.lt.s32.totalorder %s12, 2
      // Predicated region
      $region13: #{tpu_custom_call.1} parent=5 // pred_check
        %p161 = pneg %p160
      $region14: #{tpu_custom_call.1} parent=5 // pred_check_branch
        %163 = sbr.rel (%p161) target = $region16
      $region15: #{tpu_custom_call.1} parent=5 // pred_region
        // Predicated region
        $region17: #{tpu_custom_call.1} parent=15 // pred_check
          %p164 = pneg %p55
        $region18: #{tpu_custom_call.1} parent=15 // pred_check_branch
          %166 = sbr.rel (%p164) target = $region20
        $region19: #{tpu_custom_call.1} parent=15 // pred_region
          %p167 = scmp.lt.s32.totalorder %s19, 1
          %s168 = scalar_select %p167, %s19, 1
          %p169 = scmp.lt.s32.totalorder %s20, 0
          %s170 = scalar_select %p169, %s20, 0
          %p171 = scmp.lt.s32.totalorder %s21, 0
          %s172 = scalar_select %p171, %s21, 0
          %s173 = sadd.s32 %s172, %s170
          %s174 = sadd.s32 %s173, %s168
          %s175 = smul.addr %s174, 8
          %s176 = scalar_lea.vmem %s0, %s175
        $region20: #{tpu_custom_call.1} parent=15 // pred_fallthru
          _
        // Predicated region
        $region21: #{tpu_custom_call.1} parent=15 // pred_check
          %p177 = pneg %p83
        $region22: #{tpu_custom_call.1} parent=15 // pred_check_branch
          %179 = sbr.rel (%p177) target = $region24
        $region23: #{tpu_custom_call.1} parent=15 // pred_region
          %p180 = scmp.lt.s32.totalorder %s19, 1
          %s181 = scalar_select %p180, %s19, 1
          %p182 = scmp.lt.s32.totalorder %s21, 0
          %s183 = scalar_select %p182, %s21, 0
          %s184 = sadd.s32 %s183, %s181
          %s185 = scalar_lea.vmem %s1, %s184
        $region24: #{tpu_custom_call.1} parent=15 // pred_fallthru
          _
        // Predicated region
        $region25: #{tpu_custom_call.1} parent=15 // pred_check
          %p186 = pneg %p111
        $region26: #{tpu_custom_call.1} parent=15 // pred_check_branch
          %188 = sbr.rel (%p186) target = $region28
        $region27: #{tpu_custom_call.1} parent=15 // pred_region
          %p189 = scmp.lt.s32.totalorder %s19, 1
          %s190 = scalar_select %p189, %s19, 1
          %p191 = scmp.lt.s32.totalorder %s20, 0
          %s192 = scalar_select %p191, %s20, 0
          %s193 = sadd.s32 %s192, %s190
          %s194 = smul.addr %s193, 8
          %s195 = scalar_lea.vmem %s2, %s194
        $region28: #{tpu_custom_call.1} parent=15 // pred_fallthru
          _
      $region16: #{tpu_custom_call.1} parent=5 // pred_fallthru
        _
      %p196 = scmp.le.s32.totalorder 1, %s12
      %p197 = scmp.lt.s32.totalorder %s12, 3
      %p198 = pnand %p196, %p197
      %p199 = pneg %p198
      // Predicated region
      $region29: #{tpu_custom_call.1} parent=5 // pred_check
        _
      $region30: #{tpu_custom_call.1} parent=5 // pred_check_branch
        %201 = sbr.rel (%p198) target = $region32
      $region31: #{tpu_custom_call.1} parent=5 // pred_region
        %s202 = ssub.s32 %s12, 1
        %p203 = scmp.lt.s32.totalorder %s22, 1
        %s204 = scalar_select %p203, %s22, 1
        %p205 = scmp.lt.s32.totalorder %s23, 0
        %s206 = scalar_select %p205, %s23, 0
        %p207 = scmp.lt.s32.totalorder %s24, 0
        %s208 = scalar_select %p207, %s24, 0
        %s209 = sadd.s32 %s208, %s206
        %s210 = sadd.s32 %s209, %s204
        %s211 = smul.addr %s210, 8
        %s212 = scalar_lea.vmem %s0, %s211
        %p213 = pneg %p61
        %p214 = pneg %p58
        %p215 = scmp.lt.s32.totalorder %s22, 1
        %s216 = scalar_select %p215, %s22, 1
        %p217 = scmp.lt.s32.totalorder %s24, 0
        %s218 = scalar_select %p217, %s24, 0
        %s219 = sadd.s32 %s218, %s216
        %s220 = scalar_lea.vmem %s1, %s219
        %p221 = pneg %p89
        %p222 = pneg %p86
        %p223 = scmp.lt.s32.totalorder %s22, 1
        %s224 = scalar_select %p223, %s22, 1
        %p225 = scmp.lt.s32.totalorder %s23, 0
        %s226 = scalar_select %p225, %s23, 0
        %s227 = sadd.s32 %s226, %s224
        %s228 = smul.addr %s227, 8
        %s229 = scalar_lea.vmem %s2, %s228
        %p230 = pneg %p117
        %p231 = pneg %p114
        %p232 = pneg %p145
        %p233 = pneg %p142
        %s234 = sand.u32 %s132, 1
        %s235 = scalar_lea.sflag [#allocation3], %s234
        %s236 = sand.u32 %s132, 1
        %s237 = smul.addr %s236, 8
        %s238 = scalar_lea.vmem [#allocation2], %s237
        %p239 = scmp.lt.s32.totalorder %s22, 1
        %s240 = scalar_select %p239, %s22, 1
        %p241 = scmp.lt.s32.totalorder %s23, 0
        %s242 = scalar_select %p241, %s23, 0
        %p243 = scmp.lt.s32.totalorder %s24, 0
        %s244 = scalar_select %p243, %s24, 0
        %s245 = sadd.s32 %s244, %s242
        %s246 = sadd.s32 %s245, %s240
        %s247 = smul.addr %s246, 8
        %s248 = scalar_lea.vmem %s0, %s247
        %p249 = scmp.lt.s32.totalorder %s22, 1
        %s250 = scalar_select %p249, %s22, 1
        %p251 = scmp.lt.s32.totalorder %s24, 0
        %s252 = scalar_select %p251, %s24, 0
        %s253 = sadd.s32 %s252, %s250
        %s254 = scalar_lea.vmem %s1, %s253
        %p255 = scmp.lt.s32.totalorder %s22, 1
        %s256 = scalar_select %p255, %s22, 1
        %p257 = scmp.lt.s32.totalorder %s23, 0
        %s258 = scalar_select %p257, %s23, 0
        %s259 = sadd.s32 %s258, %s256
        %s260 = smul.addr %s259, 8
        %s261 = scalar_lea.vmem %s2, %s260
        %v262 = vld [vmem:[%s248] sm:$0xff]
        %v263 = vld [vmem:[%s254] sm:$0x1]
        %vm264 = vcmp.gt.f32.partialorder %v263, 0.0
        %v265 = vsel %vm264, 1, 0
        %v266 = vlaneseq
        %v267 = vshrl.u32 %v266, 7
        %v268 = vsub.s32 0, %v267
        %v269 = vrot.slane %v265, %v268
        %vm270 = vcmp.eq.s32.totalorder %v269, 1
        %v271 = vsel %vm270, %v262, 3.0
        %v272 = vsub.f32 %v271, 1.0
        %v273 = vmul.f32 %v272, %v272
        %v274 = vmul.f32 %v273, -500000.0
        %v275 = vmul.f32 %v274, 1.442695
        %v276 = vpow.pop %v275
        %vm277 = vcmask 130048
        %v278 = vsel %vm277, %v276, 0.0
        %279 = vadd.xlane.f32.xlu0 %v278
        %v280 = vpop.xlane.xlu0 %279
        %v281 = vsub.f32 %v271, 0.1
        %v282 = vmul.f32 %v281, -50.0
        %v283 = vmul.f32 %v282, %v281
        %v284 = vmul.f32 %v283, 1.442695
        %v285 = vpow.pop %v284
        %v286 = vsel %vm277, %v285, 0.0
        %287 = vadd.xlane.f32.xlu0 %v286
        %v288 = vpop.xlane.xlu0 %287
        %v289 = vmul.f32 %v281, 20.0
        %v290 = vsub.f32 %v289, 2.0
        %v291 = vmul.f32 %v290, 1.442695
        %v292 = vpow.pop %v291
        %v293 = vrcp.pop %v292
        %v294 = vmul.f32 %v293, 0.01831564
        %v295 = vmul.f32 %v285, %v292
        %v296 = vsel %vm277, %v295, 0.0
        %297 = vadd.xlane.f32.xlu0 %v296
        %v298 = vpop.xlane.xlu0 %297
        %v299 = vmul.f32 %v292, 0.01831564
        %v300 = vmul.f32 %v295, %v299
        %v301 = vsel %vm277, %v300, 0.0
        %302 = vadd.xlane.f32.xlu0 %v301
        %v303 = vpop.xlane.xlu0 %302
        %v304 = vmul.f32 %v299, 0.01831564
        %v305 = vmul.f32 %v300, %v304
        %v306 = vsel %vm277, %v305, 0.0
        %307 = vadd.xlane.f32.xlu0 %v306
        %v308 = vpop.xlane.xlu0 %307
        %v309 = vmul.f32 %v304, 0.01831564
        %v310 = vmul.f32 %v305, %v309
        %v311 = vsel %vm277, %v310, 0.0
        %312 = vadd.xlane.f32.xlu0 %v311
        %v313 = vpop.xlane.xlu0 %312
        %v314 = vmul.f32 %v285, %v294
        %v315 = vsel %vm277, %v314, 0.0
        %316 = vadd.xlane.f32.xlu0 %v315
        %v317 = vpop.xlane.xlu0 %316
        %v318 = vmul.f32 %v294, 0.01831564
        %v319 = vmul.f32 %v314, %v318
        %v320 = vsel %vm277, %v319, 0.0
        %321 = vadd.xlane.f32.xlu0 %v320
        %v322 = vpop.xlane.xlu0 %321
        %v323 = vmul.f32 %v318, 0.01831564
        %v324 = vmul.f32 %v319, %v323
        %v325 = vsel %vm277, %v324, 0.0
        %326 = vadd.xlane.f32.xlu0 %v325
        %v327 = vpop.xlane.xlu0 %326
        %v328 = vmul.f32 %v323, 0.01831564
        %v329 = vmul.f32 %v324, %v328
        %v330 = vsel %vm277, %v329, 0.0
        %331 = vadd.xlane.f32.xlu0 %v330
        %v332 = vpop.xlane.xlu0 %331
        %v333 = vmul.f32 %v328, 0.01831564
        %v334 = vmul.f32 %v329, %v333
        %v335 = vsel %vm277, %v334, 0.0
        %336 = vadd.xlane.f32.xlu0 %v335
        %v337 = vpop.xlane.xlu0 %336
        %vm338 = vcmask 7168
        %v339 = vsel %vm338, %v280, %v313
        %vm340 = vcmask 15360
        %v341 = vsel %vm340, %v339, %v308
        %vm342 = vcmask 23552
        %v343 = vsel %vm342, %v341, %v303
        %vm344 = vcmask 31744
        %v345 = vsel %vm344, %v343, %v298
        %vm346 = vcmask 39936
        %v347 = vsel %vm346, %v345, %v288
        %vm348 = vcmask 48128
        %v349 = vsel %vm348, %v347, %v317
        %vm350 = vcmask 56320
        %v351 = vsel %vm350, %v349, %v322
        %vm352 = vcmask 64512
        %v353 = vsel %vm352, %v351, %v327
        %vm354 = vcmask 72704
        %v355 = vsel %vm354, %v353, %v332
        %vm356 = vcmask 80896
        %v357 = vsel %vm356, %v355, %v337
        %vm358 = vcmask 89088
        %v359 = vsel %vm358, %v357, 0.0
        %v360 = vld [vmem:[%s261] sm:$0xff]
        %v361 = vmax.f32 %v359, 1e-10
        %v362 = vlog2.pop %v361
        %v363 = vmul.f32 %v362, 0.6931472
        %v364 = vmul.f32 %v363, 0.01
        %366 = vset.pattern.permute.xlu0 0
        %367 = vperm.xlu0 %366, %v360
        %v368 = vpop.permute.xlu0 %367
        %v370 = vmul.f32 %v364, %v368
        %371 = vst [vmem:[%s238] sm:$0xff] %v370
        %s372 = sand.u32 %s132, 1
        %s373 = scalar_lea.sflag [#allocation3], %s372
        %s374 = sand.u32 %s132, 1
        %s375 = smul.addr %s374, 8
        %s376 = scalar_lea.vmem [#allocation2], %s375
        // Predicated region
        $region33: #{tpu_custom_call.1} parent=31 // pred_check
          %p377 = pneg %p142
        $region34: #{tpu_custom_call.1} parent=31 // pred_check_branch
          %379 = sbr.rel (%p377) target = $region36
        $region35: #{tpu_custom_call.1} parent=31 // pred_region
          %s381 = ssub.s32 128, 128
          %382 = vsyncadd %s373, %s381
          %s383 = sadd.s32 %s23, %s22
          %s384 = smul.addr %s383, 128
          %s385 = scalar_lea.hbm %s3, %s384
          %s387 = sshll.u32 %s376, 4
          %s388 = int_to_ptr.vmem [resolvable:$true] %s387
          %390 = dma.vmem_to_hbm [thread:$0]  %s388, 128, %s385, %s373
        $region36: #{tpu_custom_call.1} parent=31 // pred_fallthru
          _
      $region32: #{tpu_custom_call.1} parent=5 // pred_fallthru
        _
      %p391 = scmp.le.s32.totalorder 2, %s12
      // Predicated region
      $region37: #{tpu_custom_call.1} parent=5 // pred_check
        %p392 = pneg %p391
      $region38: #{tpu_custom_call.1} parent=5 // pred_check_branch
        %394 = sbr.rel (%p392) target = $region40
      $region39: #{tpu_custom_call.1} parent=5 // pred_region
        %s395 = ssub.s32 %s12, 2
        // Predicated region
        $region41: #{tpu_custom_call.1} parent=39 // pred_check
          %p396 = pneg %p148
        $region42: #{tpu_custom_call.1} parent=39 // pred_check_branch
          %398 = sbr.rel (%p396) target = $region44
        $region43: #{tpu_custom_call.1} parent=39 // pred_region
          %s399 = sand.u32 %s133, 1
          %s400 = scalar_lea.sflag [#allocation3], %s399
          %s401 = sand.u32 %s133, 1
          %s402 = smul.addr %s401, 8
          %s403 = scalar_lea.vmem [#allocation2], %s402
          %404 = dma.done %s400, 128
        $region44: #{tpu_custom_call.1} parent=39 // pred_fallthru
          _
      $region40: #{tpu_custom_call.1} parent=5 // pred_fallthru
        _
    $region6: #{tpu_custom_call.1} parent=1 // loop_footer
      %s16 = sadd.s32 1, %s12
    $region7: #{tpu_custom_call.1} parent=1 // loop_footer_branch
      %11 = sbr.rel target = $region3
    $region8: #{tpu_custom_call.1} parent=1 // loop_exit
      _
    %405 = vsyncpa [#allocation3], 1
    %s406 = scalar_lea.sflag [#allocation3], 1
    %407 = vsyncpa %s406, 1

</llo_original>
